<compile_context>
chip_gen: v7x
topology: tpu7x:2x2x1
jax: 0.10.0
libtpu: 0.0.40
codegen_flags: <defaults>
</compile_context>

<pallas_src>
import functools

import jax
import jax.numpy as jnp
from jax.experimental import pallas as pl
from jax.experimental.pallas import tpu as pltpu

HIDDEN = 64


def _mlp_kernel(xt_ref, gt_ref, w1a_ref, w1b_ref, b1_ref, w2_ref, b2_ref,
                w3_ref, b3_ref, w4_ref, b4_ref, out_ref):
    """Fused 4-layer MLP forward for one batch tile, transposed layout.

    xt:  (Dx, TB)   gt: (Dg, TB)        -- batch on lanes
    wKa: (64, Dx)   wKb: (64, Dg)  w2/w3: (64, 64)  w4: (D_out, 64)
    bK:  (out_features, 1)
    out: (D_out, TB)
    """
    h = (jnp.dot(w1a_ref[...], xt_ref[...], preferred_element_type=jnp.float32)
         + jnp.dot(w1b_ref[...], gt_ref[...], preferred_element_type=jnp.float32)
         + b1_ref[...])
    h = jnp.maximum(h, 0.0)

    h = jnp.dot(w2_ref[...], h, preferred_element_type=jnp.float32) + b2_ref[...]
    h = jnp.maximum(h, 0.0)

    h = jnp.dot(w3_ref[...], h, preferred_element_type=jnp.float32) + b3_ref[...]
    h = jnp.maximum(h, 0.0)

    y = jnp.dot(w4_ref[...], h, preferred_element_type=jnp.float32) + b4_ref[...]
    out_ref[...] = y.astype(out_ref.dtype)


@functools.partial(jax.jit, static_argnames=("batch_tile",))
def joint_mlp_forward(x, gamma, params, *, batch_tile=256):
    """Pallas implementation of JointMLP.forward(x, gamma).

    batch_tile: use multiples of 256 on v6e/v7x, multiples of 128 on v5e.
    """
    x = x.astype(jnp.float32)
    gamma = gamma.astype(jnp.float32)
    B, Dx = x.shape
    Dg = gamma.shape[1]
    D_in = Dx + Dg
    w1, b1, w2, b2, w3, b3, w4, b4 = params
    D_out = w4.shape[1]

    # Pad batch to a multiple of batch_tile so the tile choice never depends on B.
    n_tiles = pl.cdiv(B, batch_tile)
    Bp = n_tiles * batch_tile
    pad = Bp - B

    # Layout plumbing (cheap): features on sublanes, batch on lanes.
    xt = jnp.pad(x, ((0, pad), (0, 0))).T            # (Dx, Bp)
    gt = jnp.pad(gamma, ((0, pad), (0, 0))).T        # (Dg, Bp)

    # Split W1 (no concat needed) and pre-transpose all weights for h^T = W^T @ x^T.
    w1a_t = w1[:Dx, :].T                             # (64, Dx)
    w1b_t = w1[Dx:, :].T                             # (64, Dg)
    w2_t = w2.T                                      # (64, 64)
    w3_t = w3.T                                      # (64, 64)
    w4_t = w4.T                                      # (D_out, 64)
    b1_t = b1.reshape(-1, 1)
    b2_t = b2.reshape(-1, 1)
    b3_t = b3.reshape(-1, 1)
    b4_t = b4.reshape(-1, 1)

    grid = (n_tiles,)

    # Weights/biases: constant-index full blocks, resident in VMEM for all steps.
    def _full(arr):
        return pl.BlockSpec(arr.shape, lambda i: (0, 0),
                            memory_space=pltpu.MemorySpace.VMEM)

    # Advisory cost hint for the XLA scheduler.
    flops = 2 * Bp * (D_in * HIDDEN + HIDDEN * HIDDEN + HIDDEN * HIDDEN
                      + HIDDEN * D_out)
    param_bytes = 4 * (D_in * HIDDEN + 2 * HIDDEN * HIDDEN + HIDDEN * D_out
                       + 3 * HIDDEN + D_out)
    bytes_accessed = 4 * Bp * (D_in + D_out) + param_bytes

    out_t = pl.pallas_call(
        _mlp_kernel,
        out_shape=jax.ShapeDtypeStruct((D_out, Bp), jnp.float32),
        grid_spec=pltpu.PrefetchScalarGridSpec(
            num_scalar_prefetch=0,
            grid=grid,
            in_specs=[
                pl.BlockSpec((Dx, batch_tile), lambda i: (0, i)),   # x^T tile
                pl.BlockSpec((Dg, batch_tile), lambda i: (0, i)),   # gamma^T tile
                _full(w1a_t), _full(w1b_t), _full(b1_t),
                _full(w2_t), _full(b2_t),
                _full(w3_t), _full(b3_t),
                _full(w4_t), _full(b4_t),
            ],
            out_specs=pl.BlockSpec((D_out, batch_tile), lambda i: (0, i)),
        ),
        compiler_params=pltpu.CompilerParams(
            dimension_semantics=("parallel",)),
        cost_estimate=pl.CostEstimate(flops=flops, transcendentals=0,
                                      bytes_accessed=bytes_accessed),
    )(xt, gt, w1a_t, w1b_t, b1_t, w2_t, b2_t, w3_t, b3_t, w4_t, b4_t)

    # Back to the PyTorch-facing (B, D_out) layout, dropping batch padding.
    return out_t[:, :B].T


def init_params(key, input_dim, output_dim):
    """Deterministic init mimicking torch.nn.Linear default (uniform +-1/sqrt(fan_in)).

    Weights are stored (in_features, out_features) so y = x @ W + b matches
    PyTorch's x @ W_pt.T + b.
    """
    dims = [(input_dim, HIDDEN), (HIDDEN, HIDDEN), (HIDDEN, HIDDEN),
            (HIDDEN, output_dim)]
    params = []
    for fan_in, fan_out in dims:
        key, kw, kb = jax.random.split(key, 3)
        bound = 1.0 / (fan_in ** 0.5)
        w = jax.random.uniform(kw, (fan_in, fan_out), jnp.float32, -bound, bound)
        b = jax.random.uniform(kb, (fan_out,), jnp.float32, -bound, bound)
        params += [w, b]
    return tuple(params)


def reference_forward(x, gamma, params):
    inp = jnp.concatenate([x, gamma], axis=-1).astype(jnp.float32)
    w1, b1, w2, b2, w3, b3, w4, b4 = params
    h = jnp.maximum(inp @ w1 + b1, 0.0)
    h = jnp.maximum(h @ w2 + b2, 0.0)
    h = jnp.maximum(h @ w3 + b3, 0.0)
    return h @ w4 + b4


if __name__ == "__main__":
    key = jax.random.PRNGKey(0)
    kp = jax.random.fold_in(key, 1234)

    x_dim, gamma_dim, output_dim = 24, 8, 4
    input_dim = x_dim + gamma_dim          # == torch Linear(input_dim, 64)
    params = init_params(kp, input_dim, output_dim)

    # Exercise: tiny batch (single padded tile), tile-unaligned batch, and an
    # exact multi-tile batch (grid length 2 -> megacore sharding on v7x).
    for batch in (8, 300, 512):
        kb = jax.random.fold_in(key, batch)
        kx, kg = jax.random.split(kb)
        x = jax.random.normal(kx, (batch, x_dim), jnp.float32)
        gamma = jax.random.uniform(kg, (batch, gamma_dim), jnp.float32)

        out = jax.block_until_ready(joint_mlp_forward(x, gamma, params))
        ref = reference_forward(x, gamma, params)

        assert out.shape == (batch, output_dim), out.shape
        assert jnp.allclose(out, ref, atol=1e-4, rtol=1e-4), \
            f"mismatch vs reference at batch={batch}"

    print("KERNEL_OK")
</pallas_src>

<mosaic_0001>
module attributes {stable_mosaic.version = 11 : i64} {
  func.func @_mlp_kernel(%arg0: i32, %arg1: memref<24x256xf32, #tpu.memory_space<vmem>>, %arg2: memref<8x256xf32, #tpu.memory_space<vmem>>, %arg3: memref<64x24xf32, #tpu.memory_space<vmem>>, %arg4: memref<64x8xf32, #tpu.memory_space<vmem>>, %arg5: memref<64x1xf32, #tpu.memory_space<vmem>>, %arg6: memref<64x64xf32, #tpu.memory_space<vmem>>, %arg7: memref<64x1xf32, #tpu.memory_space<vmem>>, %arg8: memref<64x64xf32, #tpu.memory_space<vmem>>, %arg9: memref<64x1xf32, #tpu.memory_space<vmem>>, %arg10: memref<4x64xf32, #tpu.memory_space<vmem>>, %arg11: memref<4x1xf32, #tpu.memory_space<vmem>>, %arg12: memref<4x256xf32, #tpu.memory_space<vmem>>) attributes {dimension_semantics = [#tpu.dimension_semantics<parallel>], iteration_bounds = array<i64: 1>, scalar_prefetch = 0 : i64, scratch_operands = 0 : i64, tpu.core_type = #tpu.core_type<tc>, window_params = [{transform_indices = @transform_0, window_bounds = array<i64: 24, 256>}, {transform_indices = @transform_1, window_bounds = array<i64: 8, 256>}, {pipeline_mode = #tpu.pipeline_mode<synchronous>, transform_indices = @transform_2, window_bounds = array<i64: 64, 24>}, {pipeline_mode = #tpu.pipeline_mode<synchronous>, transform_indices = @transform_3, window_bounds = array<i64: 64, 8>}, {pipeline_mode = #tpu.pipeline_mode<synchronous>, transform_indices = @transform_4, window_bounds = array<i64: 64, 1>}, {pipeline_mode = #tpu.pipeline_mode<synchronous>, transform_indices = @transform_5, window_bounds = array<i64: 64, 64>}, {pipeline_mode = #tpu.pipeline_mode<synchronous>, transform_indices = @transform_6, window_bounds = array<i64: 64, 1>}, {pipeline_mode = #tpu.pipeline_mode<synchronous>, transform_indices = @transform_7, window_bounds = array<i64: 64, 64>}, {pipeline_mode = #tpu.pipeline_mode<synchronous>, transform_indices = @transform_8, window_bounds = array<i64: 64, 1>}, {pipeline_mode = #tpu.pipeline_mode<synchronous>, transform_indices = @transform_9, window_bounds = array<i64: 4, 64>}, {pipeline_mode = #tpu.pipeline_mode<synchronous>, transform_indices = @transform_10, window_bounds = array<i64: 4, 1>}, {transform_indices = @transform_11, window_bounds = array<i64: 4, 256>}]} {
    %c0 = arith.constant 0 : index
    %c0_0 = arith.constant 0 : index
    %0 = vector.load %arg3[%c0, %c0_0] : memref<64x24xf32, #tpu.memory_space<vmem>>, vector<64x24xf32>
    %c0_1 = arith.constant 0 : index
    %c0_2 = arith.constant 0 : index
    %1 = vector.load %arg1[%c0_1, %c0_2] : memref<24x256xf32, #tpu.memory_space<vmem>>, vector<24x256xf32>
    %cst = arith.constant dense<0.000000e+00> : vector<64x256xf32>
    %2 = tpu.matmul %0, %1, %cst {dimension_numbers = #tpu.dot_dimension_numbers<[1], [0], [0], [1], [0, 0, 1, 1], [], []>} : vector<64x24xf32>, vector<24x256xf32>, vector<64x256xf32> -> vector<64x256xf32>
    %c0_3 = arith.constant 0 : index
    %c0_4 = arith.constant 0 : index
    %3 = vector.load %arg4[%c0_3, %c0_4] : memref<64x8xf32, #tpu.memory_space<vmem>>, vector<64x8xf32>
    %c0_5 = arith.constant 0 : index
    %c0_6 = arith.constant 0 : index
    %4 = vector.load %arg2[%c0_5, %c0_6] : memref<8x256xf32, #tpu.memory_space<vmem>>, vector<8x256xf32>
    %cst_7 = arith.constant dense<0.000000e+00> : vector<64x256xf32>
    %5 = tpu.matmul %3, %4, %cst_7 {dimension_numbers = #tpu.dot_dimension_numbers<[1], [0], [0], [1], [0, 0, 1, 1], [], []>} : vector<64x8xf32>, vector<8x256xf32>, vector<64x256xf32> -> vector<64x256xf32>
    %6 = arith.addf %2, %5 : vector<64x256xf32>
    %c0_8 = arith.constant 0 : index
    %c0_9 = arith.constant 0 : index
    %7 = vector.load %arg5[%c0_8, %c0_9] : memref<64x1xf32, #tpu.memory_space<vmem>>, vector<64x1xf32>
    %8 = vector.broadcast %7 : vector<64x1xf32> to vector<64x256xf32>
    %9 = arith.addf %6, %8 : vector<64x256xf32>
    %cst_10 = arith.constant 0.000000e+00 : f32
    %10 = vector.broadcast %cst_10 : f32 to vector<64x256xf32>
    %11 = arith.maximumf %9, %10 : vector<64x256xf32>
    %c0_11 = arith.constant 0 : index
    %c0_12 = arith.constant 0 : index
    %12 = vector.load %arg6[%c0_11, %c0_12] : memref<64x64xf32, #tpu.memory_space<vmem>>, vector<64x64xf32>
    %cst_13 = arith.constant dense<0.000000e+00> : vector<64x256xf32>
    %13 = tpu.matmul %12, %11, %cst_13 {dimension_numbers = #tpu.dot_dimension_numbers<[1], [0], [0], [1], [0, 0, 1, 1], [], []>} : vector<64x64xf32>, vector<64x256xf32>, vector<64x256xf32> -> vector<64x256xf32>
    %c0_14 = arith.constant 0 : index
    %c0_15 = arith.constant 0 : index
    %14 = vector.load %arg7[%c0_14, %c0_15] : memref<64x1xf32, #tpu.memory_space<vmem>>, vector<64x1xf32>
    %15 = vector.broadcast %14 : vector<64x1xf32> to vector<64x256xf32>
    %16 = arith.addf %13, %15 : vector<64x256xf32>
    %cst_16 = arith.constant 0.000000e+00 : f32
    %17 = vector.broadcast %cst_16 : f32 to vector<64x256xf32>
    %18 = arith.maximumf %16, %17 : vector<64x256xf32>
    %c0_17 = arith.constant 0 : index
    %c0_18 = arith.constant 0 : index
    %19 = vector.load %arg8[%c0_17, %c0_18] : memref<64x64xf32, #tpu.memory_space<vmem>>, vector<64x64xf32>
    %cst_19 = arith.constant dense<0.000000e+00> : vector<64x256xf32>
    %20 = tpu.matmul %19, %18, %cst_19 {dimension_numbers = #tpu.dot_dimension_numbers<[1], [0], [0], [1], [0, 0, 1, 1], [], []>} : vector<64x64xf32>, vector<64x256xf32>, vector<64x256xf32> -> vector<64x256xf32>
    %c0_20 = arith.constant 0 : index
    %c0_21 = arith.constant 0 : index
    %21 = vector.load %arg9[%c0_20, %c0_21] : memref<64x1xf32, #tpu.memory_space<vmem>>, vector<64x1xf32>
    %22 = vector.broadcast %21 : vector<64x1xf32> to vector<64x256xf32>
    %23 = arith.addf %20, %22 : vector<64x256xf32>
    %cst_22 = arith.constant 0.000000e+00 : f32
    %24 = vector.broadcast %cst_22 : f32 to vector<64x256xf32>
    %25 = arith.maximumf %23, %24 : vector<64x256xf32>
    %c0_23 = arith.constant 0 : index
    %c0_24 = arith.constant 0 : index
    %26 = vector.load %arg10[%c0_23, %c0_24] : memref<4x64xf32, #tpu.memory_space<vmem>>, vector<4x64xf32>
    %cst_25 = arith.constant dense<0.000000e+00> : vector<4x256xf32>
    %27 = tpu.matmul %26, %25, %cst_25 {dimension_numbers = #tpu.dot_dimension_numbers<[1], [0], [0], [1], [0, 0, 1, 1], [], []>} : vector<4x64xf32>, vector<64x256xf32>, vector<4x256xf32> -> vector<4x256xf32>
    %c0_26 = arith.constant 0 : index
    %c0_27 = arith.constant 0 : index
    %28 = vector.load %arg11[%c0_26, %c0_27] : memref<4x1xf32, #tpu.memory_space<vmem>>, vector<4x1xf32>
    %29 = vector.broadcast %28 : vector<4x1xf32> to vector<4x256xf32>
    %30 = arith.addf %27, %29 : vector<4x256xf32>
    %c0_28 = arith.constant 0 : index
    %c0_29 = arith.constant 0 : index
    %31 = vector.load %arg12[%c0_28, %c0_29] : memref<4x256xf32, #tpu.memory_space<vmem>>, vector<4x256xf32>
    tpu.vector_store %arg12[%c0_28, %c0_29], %30 {strides = array<i32>} : memref<4x256xf32, #tpu.memory_space<vmem>>, vector<4x256xf32>,
    return
  }
  func.func @transform_0(%arg0: i32) -> (i32, i32) {
    %c0_i32 = arith.constant 0 : i32
    %c0_i32_0 = arith.constant 0 : i32
    return %c0_i32, %arg0 : i32, i32
  }
  func.func @transform_1(%arg0: i32) -> (i32, i32) {
    %c0_i32 = arith.constant 0 : i32
    %c0_i32_0 = arith.constant 0 : i32
    return %c0_i32, %arg0 : i32, i32
  }
  func.func @transform_2(%arg0: i32) -> (i32, i32) {
    %c0_i32 = arith.constant 0 : i32
    %c0_i32_0 = arith.constant 0 : i32
    %c0_i32_1 = arith.constant 0 : i32
    return %c0_i32, %c0_i32_0 : i32, i32
  }
  func.func @transform_3(%arg0: i32) -> (i32, i32) {
    %c0_i32 = arith.constant 0 : i32
    %c0_i32_0 = arith.constant 0 : i32
    %c0_i32_1 = arith.constant 0 : i32
    return %c0_i32, %c0_i32_0 : i32, i32
  }
  func.func @transform_4(%arg0: i32) -> (i32, i32) {
    %c0_i32 = arith.constant 0 : i32
    %c0_i32_0 = arith.constant 0 : i32
    %c0_i32_1 = arith.constant 0 : i32
    return %c0_i32, %c0_i32_0 : i32, i32
  }
  func.func @transform_5(%arg0: i32) -> (i32, i32) {
    %c0_i32 = arith.constant 0 : i32
    %c0_i32_0 = arith.constant 0 : i32
    %c0_i32_1 = arith.constant 0 : i32
    return %c0_i32, %c0_i32_0 : i32, i32
  }
  func.func @transform_6(%arg0: i32) -> (i32, i32) {
    %c0_i32 = arith.constant 0 : i32
    %c0_i32_0 = arith.constant 0 : i32
    %c0_i32_1 = arith.constant 0 : i32
    return %c0_i32, %c0_i32_0 : i32, i32
  }
  func.func @transform_7(%arg0: i32) -> (i32, i32) {
    %c0_i32 = arith.constant 0 : i32
    %c0_i32_0 = arith.constant 0 : i32
    %c0_i32_1 = arith.constant 0 : i32
    return %c0_i32, %c0_i32_0 : i32, i32
  }
  func.func @transform_8(%arg0: i32) -> (i32, i32) {
    %c0_i32 = arith.constant 0 : i32
    %c0_i32_0 = arith.constant 0 : i32
    %c0_i32_1 = arith.constant 0 : i32
    return %c0_i32, %c0_i32_0 : i32, i32
  }
  func.func @transform_9(%arg0: i32) -> (i32, i32) {
    %c0_i32 = arith.constant 0 : i32
    %c0_i32_0 = arith.constant 0 : i32
    %c0_i32_1 = arith.constant 0 : i32
    return %c0_i32, %c0_i32_0 : i32, i32
  }
  func.func @transform_10(%arg0: i32) -> (i32, i32) {
    %c0_i32 = arith.constant 0 : i32
    %c0_i32_0 = arith.constant 0 : i32
    %c0_i32_1 = arith.constant 0 : i32
    return %c0_i32, %c0_i32_0 : i32, i32
  }
  func.func @transform_11(%arg0: i32) -> (i32, i32) {
    %c0_i32 = arith.constant 0 : i32
    %c0_i32_0 = arith.constant 0 : i32
    return %c0_i32, %arg0 : i32, i32
  }
}

</mosaic_0001>

<llo_original>
// kernel: joint_mlp_forward.1
$region0: #{joint_mlp_forward.1}
  #allocation0 [shape = 'u32[]', space=smem, size = 0x4, offset = 0x4, fixed_abs, tag = 'smem constant byte address 0x4 - core index']
  #allocation1 [shape = 'u32[144,128]{1,0:T(1,128)}', space=vmem, size = 0x12000, scoped, tag = 'internal scratch']
  %s0 = inlined_call_operand.vmem [shape: f32[24,256], index: 0, kind: input, shape index: {}]
  %s1 = inlined_call_operand.vmem [shape: f32[8,256], index: 1, kind: input, shape index: {}]
  %s2 = inlined_call_operand.vmem [shape: f32[64,24], index: 2, kind: input, shape index: {}]
  %s3 = inlined_call_operand.vmem [shape: f32[64,8], index: 3, kind: input, shape index: {}]
  %s4 = inlined_call_operand.vmem [shape: f32[64,1], index: 4, kind: input, shape index: {}]
  %s5 = inlined_call_operand.vmem [shape: f32[64,64], index: 5, kind: input, shape index: {}]
  %s6 = inlined_call_operand.vmem [shape: f32[64,1], index: 6, kind: input, shape index: {}]
  %s7 = inlined_call_operand.vmem [shape: f32[64,64], index: 7, kind: input, shape index: {}]
  %s8 = inlined_call_operand.vmem [shape: f32[64,1], index: 8, kind: input, shape index: {}]
  %s9 = inlined_call_operand.vmem [shape: f32[4,64], index: 9, kind: input, shape index: {}]
  %s10 = inlined_call_operand.vmem [shape: f32[4,1], index: 10, kind: input, shape index: {}]
  %s11 = inlined_call_operand.vmem [shape: f32[4,256], index: 11, kind: output, shape index: {}]
  %s12 = sld [smem:[#allocation0]]
  $region54: #{joint_mlp_forward.1} parent=0
    _
  %s14 = ssub.s32 1, %s12
  %s15 = scalar_select 0, %s14, %s12
  // Predicated region
  $region2: #{joint_mlp_forward.1} parent=0 // pred_check
    _
  $region3: #{joint_mlp_forward.1} parent=0 // pred_check_branch
    %17 = sbr.rel (0) target = $region5
  $region4: #{joint_mlp_forward.1} parent=0 // pred_region
    _
  $region5: #{joint_mlp_forward.1} parent=0 // pred_fallthru
    _
  // Predicated region
  $region6: #{joint_mlp_forward.1} parent=0 // pred_check
    _
  $region7: #{joint_mlp_forward.1} parent=0 // pred_check_branch
    %19 = sbr.rel (0) target = $region9
  $region8: #{joint_mlp_forward.1} parent=0 // pred_region
    _
  $region9: #{joint_mlp_forward.1} parent=0 // pred_fallthru
    _
  // Predicated region
  $region10: #{joint_mlp_forward.1} parent=0 // pred_check
    _
  $region11: #{joint_mlp_forward.1} parent=0 // pred_check_branch
    %21 = sbr.rel (0) target = $region13
  $region12: #{joint_mlp_forward.1} parent=0 // pred_region
    _
  $region13: #{joint_mlp_forward.1} parent=0 // pred_fallthru
    _
  // Predicated region
  $region14: #{joint_mlp_forward.1} parent=0 // pred_check
    _
  $region15: #{joint_mlp_forward.1} parent=0 // pred_check_branch
    %23 = sbr.rel (0) target = $region17
  $region16: #{joint_mlp_forward.1} parent=0 // pred_region
    _
  $region17: #{joint_mlp_forward.1} parent=0 // pred_fallthru
    _
  // Predicated region
  $region18: #{joint_mlp_forward.1} parent=0 // pred_check
    _
  $region19: #{joint_mlp_forward.1} parent=0 // pred_check_branch
    %25 = sbr.rel (0) target = $region21
  $region20: #{joint_mlp_forward.1} parent=0 // pred_region
    _
  $region21: #{joint_mlp_forward.1} parent=0 // pred_fallthru
    _
  // Predicated region
  $region22: #{joint_mlp_forward.1} parent=0 // pred_check
    _
  $region23: #{joint_mlp_forward.1} parent=0 // pred_check_branch
    %27 = sbr.rel (0) target = $region25
  $region24: #{joint_mlp_forward.1} parent=0 // pred_region
    _
  $region25: #{joint_mlp_forward.1} parent=0 // pred_fallthru
    _
  // Predicated region
  $region26: #{joint_mlp_forward.1} parent=0 // pred_check
    _
  $region27: #{joint_mlp_forward.1} parent=0 // pred_check_branch
    %29 = sbr.rel (0) target = $region29
  $region28: #{joint_mlp_forward.1} parent=0 // pred_region
    _
  $region29: #{joint_mlp_forward.1} parent=0 // pred_fallthru
    _
  // Predicated region
  $region30: #{joint_mlp_forward.1} parent=0 // pred_check
    _
  $region31: #{joint_mlp_forward.1} parent=0 // pred_check_branch
    %31 = sbr.rel (0) target = $region33
  $region32: #{joint_mlp_forward.1} parent=0 // pred_region
    _
  $region33: #{joint_mlp_forward.1} parent=0 // pred_fallthru
    _
  // Predicated region
  $region34: #{joint_mlp_forward.1} parent=0 // pred_check
    _
  $region35: #{joint_mlp_forward.1} parent=0 // pred_check_branch
    %33 = sbr.rel (0) target = $region37
  $region36: #{joint_mlp_forward.1} parent=0 // pred_region
    _
  $region37: #{joint_mlp_forward.1} parent=0 // pred_fallthru
    _
  // Predicated region
  $region38: #{joint_mlp_forward.1} parent=0 // pred_check
    _
  $region39: #{joint_mlp_forward.1} parent=0 // pred_check_branch
    %35 = sbr.rel (0) target = $region41
  $region40: #{joint_mlp_forward.1} parent=0 // pred_region
    _
  $region41: #{joint_mlp_forward.1} parent=0 // pred_fallthru
    _
  // Predicated region
  $region42: #{joint_mlp_forward.1} parent=0 // pred_check
    _
  $region43: #{joint_mlp_forward.1} parent=0 // pred_check_branch
    %37 = sbr.rel (0) target = $region45
  $region44: #{joint_mlp_forward.1} parent=0 // pred_region
    _
  $region45: #{joint_mlp_forward.1} parent=0 // pred_fallthru
    _
  %v38 = vld [vmem:[%s2] sm:$0xff]
  %v39 = vld [vmem:[%s2 + $0x8] sm:$0xff]
  %v40 = vld [vmem:[%s2 + $0x10] sm:$0xff]
  %v41 = vld [vmem:[%s2 + $0x18] sm:$0xff]
  %v42 = vld [vmem:[%s2 + $0x20] sm:$0xff]
  %v43 = vld [vmem:[%s2 + $0x28] sm:$0xff]
  %v44 = vld [vmem:[%s2 + $0x30] sm:$0xff]
  %v45 = vld [vmem:[%s2 + $0x38] sm:$0xff]
  %v46 = vld [vmem:[%s0] sm:$0xff]
  %v47 = vld [vmem:[%s0 + $0x8] sm:$0xff]
  %v48 = vld [vmem:[%s0 + $0x10] sm:$0xff]
  %v49 = vld [vmem:[%s0 + $0x18] sm:$0xff]
  %v50 = vld [vmem:[%s0 + $0x20] sm:$0xff]
  %v51 = vld [vmem:[%s0 + $0x28] sm:$0xff]
  %v52 = vld [vmem:[%s3] sm:$0xff]
  %v53 = vld [vmem:[%s3 + $0x8] sm:$0xff]
  %v54 = vld [vmem:[%s3 + $0x10] sm:$0xff]
  %v55 = vld [vmem:[%s3 + $0x18] sm:$0xff]
  %v56 = vld [vmem:[%s3 + $0x20] sm:$0xff]
  %v57 = vld [vmem:[%s3 + $0x28] sm:$0xff]
  %v58 = vld [vmem:[%s3 + $0x30] sm:$0xff]
  %v59 = vld [vmem:[%s3 + $0x38] sm:$0xff]
  %v60 = vld [vmem:[%s1] sm:$0xff]
  %v61 = vld [vmem:[%s1 + $0x8] sm:$0xff]
  %vm62 = vcmask 64512
  %v64 = vsel %vm62, %v52, 0
  %v67 = vsel %vm62, %v53, 0
  %v70 = vsel %vm62, %v54, 0
  %v73 = vsel %vm62, %v55, 0
  %v76 = vsel %vm62, %v56, 0
  %v79 = vsel %vm62, %v57, 0
  %v82 = vsel %vm62, %v58, 0
  %v85 = vsel %vm62, %v59, 0
  %87 = vmatprep.subr.mxu0 %v61
  %88 = vmatpush1.msra.mxu0 %v60
  %89 = vmatprep.subr.mxu0 0.0
  %90 = vmatpush1.msra.mxu0 0.0
  %91 = vmatprep.subr.mxu0 0.0
  %92 = vmatpush1.msra.mxu0 0.0
  %93 = vmatprep.subr.mxu0 0.0
  %94 = vmatpush1.msra.mxu0 0.0
  %95 = vmatprep.subr.mxu0 0.0
  %96 = vmatpush1.msra.mxu0 0.0
  %97 = vmatprep.subr.mxu0 0.0
  %98 = vmatpush1.msra.mxu0 0.0
  %99 = vmatprep.subr.mxu0 0.0
  %100 = vmatpush1.msra.mxu0 0.0
  %101 = vmatprep.subr.mxu0 0.0
  %102 = vmatpush1.msra.mxu0 0.0
  %103 = vmatprep.subr.mxu0 0.0
  %104 = vmatpush1.msra.mxu0 0.0
  %105 = vmatprep.subr.mxu0 0.0
  %106 = vmatpush1.msra.mxu0 0.0
  %107 = vmatprep.subr.mxu0 0.0
  %108 = vmatpush1.msra.mxu0 0.0
  %109 = vmatprep.subr.mxu0 0.0
  %110 = vmatpush1.msra.mxu0 0.0
  %111 = vmatprep.subr.mxu0 0.0
  %112 = vmatpush1.msra.mxu0 0.0
  %113 = vmatprep.subr.mxu0 0.0
  %114 = vmatpush1.msra.mxu0 0.0
  %115 = vmatprep.subr.mxu0 0.0
  %116 = vmatpush1.msra.mxu0 0.0
  %117 = vmatprep.subr.mxu0 0.0
  %118 = vmatpush1.msra.mxu0 0.0
  %119 = vmatprep.subr.mxu0 0.0
  %120 = vmatpush1.msra.mxu0 0.0
  %121 = vmatprep.subr.mxu0 0.0
  %122 = vmatpush1.msra.mxu0 0.0
  %123 = vmatprep.subr.mxu0 0.0
  %124 = vmatpush1.msra.mxu0 0.0
  %125 = vmatprep.subr.mxu0 0.0
  %126 = vmatpush1.msra.mxu0 0.0
  %127 = vmatprep.subr.mxu0 0.0
  %128 = vmatpush1.msra.mxu0 0.0
  %129 = vmatprep.subr.mxu0 0.0
  %130 = vmatpush1.msra.mxu0 0.0
  %131 = vmatprep.subr.mxu0 0.0
  %132 = vmatpush1.msra.mxu0 0.0
  %133 = vmatprep.subr.mxu0 0.0
  %134 = vmatpush1.msra.mxu0 0.0
  %135 = vmatprep.subr.mxu0 0.0
  %136 = vmatpush1.msra.mxu0 0.0
  %137 = vmatprep.subr.mxu0 0.0
  %138 = vmatpush1.msra.mxu0 0.0
  %139 = vmatprep.subr.mxu0 0.0
  %140 = vmatpush1.msra.mxu0 0.0
  %141 = vmatprep.subr.mxu0 0.0
  %142 = vmatpush1.msra.mxu0 0.0
  %143 = vmatprep.subr.mxu0 0.0
  %144 = vmatpush1.msra.mxu0 0.0
  %145 = vmatprep.subr.mxu0 0.0
  %146 = vmatpush1.msra.mxu0 0.0
  %147 = vmatprep.subr.mxu0 0.0
  %148 = vmatpush1.msra.mxu0 0.0
  %149 = vmatprep.subr.mxu0 0.0
  %150 = vmatpush1.msra.mxu0 0.0
  %151 = vmatprep.mubr.f32.mxu0 0.0
  %152 = vmatmul.mubr.f32.gmra.mrb[0].mxu0 %v64
  %v153 = vpop.f32.mrb[0].mxu0
  %v154 = vadd.f32 0.0, %v153
  %v155 = vpop.f32.mrb[0].mxu0
  %v156 = vadd.f32 0.0, %v155
  %157 = vmatprep.mubr.f32.mxu0 0.0
  %158 = vmatmul.mubr.f32.gmra.mrb[0].mxu0 %v67
  %v159 = vpop.f32.mrb[0].mxu0
  %v160 = vadd.f32 0.0, %v159
  %v161 = vpop.f32.mrb[0].mxu0
  %v162 = vadd.f32 0.0, %v161
  %163 = vmatprep.mubr.f32.mxu0 0.0
  %164 = vmatmul.mubr.f32.gmra.mrb[0].mxu0 %v70
  %v165 = vpop.f32.mrb[0].mxu0
  %v166 = vadd.f32 0.0, %v165
  %v167 = vpop.f32.mrb[0].mxu0
  %v168 = vadd.f32 0.0, %v167
  %169 = vmatprep.mubr.f32.mxu0 0.0
  %170 = vmatmul.mubr.f32.gmra.mrb[0].mxu0 %v73
  %v171 = vpop.f32.mrb[0].mxu0
  %v172 = vadd.f32 0.0, %v171
  %v173 = vpop.f32.mrb[0].mxu0
  %v174 = vadd.f32 0.0, %v173
  %175 = vmatprep.mubr.f32.mxu0 0.0
  %176 = vmatmul.mubr.f32.gmra.mrb[0].mxu0 %v76
  %v177 = vpop.f32.mrb[0].mxu0
  %v178 = vadd.f32 0.0, %v177
  %v179 = vpop.f32.mrb[0].mxu0
  %v180 = vadd.f32 0.0, %v179
  %181 = vmatprep.mubr.f32.mxu0 0.0
  %182 = vmatmul.mubr.f32.gmra.mrb[0].mxu0 %v79
  %v183 = vpop.f32.mrb[0].mxu0
  %v184 = vadd.f32 0.0, %v183
  %v185 = vpop.f32.mrb[0].mxu0
  %v186 = vadd.f32 0.0, %v185
  %187 = vmatprep.mubr.f32.mxu0 0.0
  %188 = vmatmul.mubr.f32.gmra.mrb[0].mxu0 %v82
  %v189 = vpop.f32.mrb[0].mxu0
  %v190 = vadd.f32 0.0, %v189
  %v191 = vpop.f32.mrb[0].mxu0
  %v192 = vadd.f32 0.0, %v191
  %193 = vmatprep.mubr.f32.mxu0 0.0
  %194 = vmatmul.mubr.f32.gmra.mrb[0].mxu0 %v85
  %v195 = vpop.f32.mrb[0].mxu0
  %v196 = vadd.f32 0.0, %v195
  %v197 = vpop.f32.mrb[0].mxu0
  %v198 = vadd.f32 0.0, %v197
  %199 = vdwg.mxu0
  %vm200 = vcmask 195584
  %v202 = vsel %vm200, %v38, 0
  %v205 = vsel %vm200, %v39, 0
  %v208 = vsel %vm200, %v40, 0
  %v211 = vsel %vm200, %v41, 0
  %v214 = vsel %vm200, %v42, 0
  %v217 = vsel %vm200, %v43, 0
  %v220 = vsel %vm200, %v44, 0
  %v223 = vsel %vm200, %v45, 0
  %225 = vmatprep.subr.mxu0 %v47
  %226 = vmatpush1.msra.mxu0 %v46
  %227 = vmatprep.subr.mxu0 %v49
  %228 = vmatpush1.msra.mxu0 %v48
  %229 = vmatprep.subr.mxu0 %v51
  %230 = vmatpush1.msra.mxu0 %v50
  %231 = vmatprep.subr.mxu0 0.0
  %232 = vmatpush1.msra.mxu0 0.0
  %233 = vmatprep.subr.mxu0 0.0
  %234 = vmatpush1.msra.mxu0 0.0
  %235 = vmatprep.subr.mxu0 0.0
  %236 = vmatpush1.msra.mxu0 0.0
  %237 = vmatprep.subr.mxu0 0.0
  %238 = vmatpush1.msra.mxu0 0.0
  %239 = vmatprep.subr.mxu0 0.0
  %240 = vmatpush1.msra.mxu0 0.0
  %241 = vmatprep.subr.mxu0 0.0
  %242 = vmatpush1.msra.mxu0 0.0
  %243 = vmatprep.subr.mxu0 0.0
  %244 = vmatpush1.msra.mxu0 0.0
  %245 = vmatprep.subr.mxu0 0.0
  %246 = vmatpush1.msra.mxu0 0.0
  %247 = vmatprep.subr.mxu0 0.0
  %248 = vmatpush1.msra.mxu0 0.0
  %249 = vmatprep.subr.mxu0 0.0
  %250 = vmatpush1.msra.mxu0 0.0
  %251 = vmatprep.subr.mxu0 0.0
  %252 = vmatpush1.msra.mxu0 0.0
  %253 = vmatprep.subr.mxu0 0.0
  %254 = vmatpush1.msra.mxu0 0.0
  %255 = vmatprep.subr.mxu0 0.0
  %256 = vmatpush1.msra.mxu0 0.0
  %257 = vmatprep.subr.mxu0 0.0
  %258 = vmatpush1.msra.mxu0 0.0
  %259 = vmatprep.subr.mxu0 0.0
  %260 = vmatpush1.msra.mxu0 0.0
  %261 = vmatprep.subr.mxu0 0.0
  %262 = vmatpush1.msra.mxu0 0.0
  %263 = vmatprep.subr.mxu0 0.0
  %264 = vmatpush1.msra.mxu0 0.0
  %265 = vmatprep.subr.mxu0 0.0
  %266 = vmatpush1.msra.mxu0 0.0
  %267 = vmatprep.subr.mxu0 0.0
  %268 = vmatpush1.msra.mxu0 0.0
  %269 = vmatprep.subr.mxu0 0.0
  %270 = vmatpush1.msra.mxu0 0.0
  %271 = vmatprep.subr.mxu0 0.0
  %272 = vmatpush1.msra.mxu0 0.0
  %273 = vmatprep.subr.mxu0 0.0
  %274 = vmatpush1.msra.mxu0 0.0
  %275 = vmatprep.subr.mxu0 0.0
  %276 = vmatpush1.msra.mxu0 0.0
  %277 = vmatprep.subr.mxu0 0.0
  %278 = vmatpush1.msra.mxu0 0.0
  %279 = vmatprep.subr.mxu0 0.0
  %280 = vmatpush1.msra.mxu0 0.0
  %281 = vmatprep.subr.mxu0 0.0
  %282 = vmatpush1.msra.mxu0 0.0
  %283 = vmatprep.subr.mxu0 0.0
  %284 = vmatpush1.msra.mxu0 0.0
  %285 = vmatprep.subr.mxu0 0.0
  %286 = vmatpush1.msra.mxu0 0.0
  %287 = vmatprep.subr.mxu0 0.0
  %288 = vmatpush1.msra.mxu0 0.0
  %289 = vmatprep.mubr.f32.mxu0 0.0
  %290 = vmatmul.mubr.f32.gmra.mrb[0].mxu0 %v202
  %v291 = vpop.f32.mrb[0].mxu0
  %v292 = vadd.f32 %v154, %v291
  %v293 = vpop.f32.mrb[0].mxu0
  %v294 = vadd.f32 %v156, %v293
  %295 = vmatprep.mubr.f32.mxu0 0.0
  %296 = vmatmul.mubr.f32.gmra.mrb[0].mxu0 %v205
  %v297 = vpop.f32.mrb[0].mxu0
  %v298 = vadd.f32 %v160, %v297
  %v299 = vpop.f32.mrb[0].mxu0
  %v300 = vadd.f32 %v162, %v299
  %301 = vmatprep.mubr.f32.mxu0 0.0
  %302 = vmatmul.mubr.f32.gmra.mrb[0].mxu0 %v208
  %v303 = vpop.f32.mrb[0].mxu0
  %v304 = vadd.f32 %v166, %v303
  %v305 = vpop.f32.mrb[0].mxu0
  %v306 = vadd.f32 %v168, %v305
  %307 = vmatprep.mubr.f32.mxu0 0.0
  %308 = vmatmul.mubr.f32.gmra.mrb[0].mxu0 %v211
  %v309 = vpop.f32.mrb[0].mxu0
  %v310 = vadd.f32 %v172, %v309
  %v311 = vpop.f32.mrb[0].mxu0
  %v312 = vadd.f32 %v174, %v311
  %313 = vmatprep.mubr.f32.mxu0 0.0
  %314 = vmatmul.mubr.f32.gmra.mrb[0].mxu0 %v214
  %v315 = vpop.f32.mrb[0].mxu0
  %v316 = vadd.f32 %v178, %v315
  %v317 = vpop.f32.mrb[0].mxu0
  %v318 = vadd.f32 %v180, %v317
  %319 = vmatprep.mubr.f32.mxu0 0.0
  %320 = vmatmul.mubr.f32.gmra.mrb[0].mxu0 %v217
  %v321 = vpop.f32.mrb[0].mxu0
  %v322 = vadd.f32 %v184, %v321
  %v323 = vpop.f32.mrb[0].mxu0
  %v324 = vadd.f32 %v186, %v323
  %325 = vmatprep.mubr.f32.mxu0 0.0
  %326 = vmatmul.mubr.f32.gmra.mrb[0].mxu0 %v220
  %v327 = vpop.f32.mrb[0].mxu0
  %v328 = vadd.f32 %v190, %v327
  %v329 = vpop.f32.mrb[0].mxu0
  %v330 = vadd.f32 %v192, %v329
  %331 = vmatprep.mubr.f32.mxu0 0.0
  %332 = vmatmul.mubr.f32.gmra.mrb[0].mxu0 %v223
  %v333 = vpop.f32.mrb[0].mxu0
  %v334 = vadd.f32 %v196, %v333
  %v335 = vpop.f32.mrb[0].mxu0
  %v336 = vadd.f32 %v198, %v335
  %337 = vdwg.mxu0
  %v338 = vld [vmem:[%s4] sm:$0xff]
  %v339 = vld [vmem:[%s4 + $0x8] sm:$0xff]
  %v340 = vld [vmem:[%s4 + $0x10] sm:$0xff]
  %v341 = vld [vmem:[%s4 + $0x18] sm:$0xff]
  %v342 = vld [vmem:[%s4 + $0x20] sm:$0xff]
  %v343 = vld [vmem:[%s4 + $0x28] sm:$0xff]
  %v344 = vld [vmem:[%s4 + $0x30] sm:$0xff]
  %v345 = vld [vmem:[%s4 + $0x38] sm:$0xff]
  %347 = vset.pattern.permute.xlu0 0
  %348 = vperm.xlu0 %347, %v338
  %v349 = vpop.permute.xlu0 %348
  %352 = vset.pattern.permute.xlu0 0
  %353 = vperm.xlu0 %352, %v339
  %v354 = vpop.permute.xlu0 %353
  %357 = vset.pattern.permute.xlu0 0
  %358 = vperm.xlu0 %357, %v340
  %v359 = vpop.permute.xlu0 %358
  %362 = vset.pattern.permute.xlu0 0
  %363 = vperm.xlu0 %362, %v341
  %v364 = vpop.permute.xlu0 %363
  %367 = vset.pattern.permute.xlu0 0
  %368 = vperm.xlu0 %367, %v342
  %v369 = vpop.permute.xlu0 %368
  %372 = vset.pattern.permute.xlu0 0
  %373 = vperm.xlu0 %372, %v343
  %v374 = vpop.permute.xlu0 %373
  %377 = vset.pattern.permute.xlu0 0
  %378 = vperm.xlu0 %377, %v344
  %v379 = vpop.permute.xlu0 %378
  %382 = vset.pattern.permute.xlu0 0
  %383 = vperm.xlu0 %382, %v345
  %v384 = vpop.permute.xlu0 %383
  %v386 = vadd.f32 %v292, %v349
  %v387 = vadd.f32 %v294, %v349
  %v388 = vadd.f32 %v298, %v354
  %v389 = vadd.f32 %v300, %v354
  %v390 = vadd.f32 %v304, %v359
  %v391 = vadd.f32 %v306, %v359
  %v392 = vadd.f32 %v310, %v364
  %v393 = vadd.f32 %v312, %v364
  %v394 = vadd.f32 %v316, %v369
  %v395 = vadd.f32 %v318, %v369
  %v396 = vadd.f32 %v322, %v374
  %v397 = vadd.f32 %v324, %v374
  %v398 = vadd.f32 %v328, %v379
  %v399 = vadd.f32 %v330, %v379
  %v400 = vadd.f32 %v334, %v384
  %v401 = vadd.f32 %v336, %v384
  %v402 = vmax.f32 %v386, 0.0
  %v403 = vmax.f32 %v387, 0.0
  %v404 = vmax.f32 %v388, 0.0
  %v405 = vmax.f32 %v389, 0.0
  %v406 = vmax.f32 %v390, 0.0
  %v407 = vmax.f32 %v391, 0.0
  %v408 = vmax.f32 %v392, 0.0
  %v409 = vmax.f32 %v393, 0.0
  %v410 = vmax.f32 %v394, 0.0
  %v411 = vmax.f32 %v395, 0.0
  %v412 = vmax.f32 %v396, 0.0
  %v413 = vmax.f32 %v397, 0.0
  %v414 = vmax.f32 %v398, 0.0
  %v415 = vmax.f32 %v399, 0.0
  %v416 = vmax.f32 %v400, 0.0
  %v417 = vmax.f32 %v401, 0.0
  %v418 = vld [vmem:[%s5] sm:$0xff]
  %v419 = vld [vmem:[%s5 + $0x8] sm:$0xff]
  %v420 = vld [vmem:[%s5 + $0x10] sm:$0xff]
  %v421 = vld [vmem:[%s5 + $0x18] sm:$0xff]
  %v422 = vld [vmem:[%s5 + $0x20] sm:$0xff]
  %v423 = vld [vmem:[%s5 + $0x28] sm:$0xff]
  %v424 = vld [vmem:[%s5 + $0x30] sm:$0xff]
  %v425 = vld [vmem:[%s5 + $0x38] sm:$0xff]
  %v426 = vld [vmem:[%s6] sm:$0xff]
  %v427 = vld [vmem:[%s6 + $0x8] sm:$0xff]
  %v428 = vld [vmem:[%s6 + $0x10] sm:$0xff]
  %v429 = vld [vmem:[%s6 + $0x18] sm:$0xff]
  %v430 = vld [vmem:[%s6 + $0x20] sm:$0xff]
  %v431 = vld [vmem:[%s6 + $0x28] sm:$0xff]
  %v432 = vld [vmem:[%s6 + $0x30] sm:$0xff]
  %v433 = vld [vmem:[%s6 + $0x38] sm:$0xff]
  %435 = vset.pattern.permute.xlu0 0
  %436 = vperm.xlu0 %435, %v426
  %v437 = vpop.permute.xlu0 %436
  %440 = vset.pattern.permute.xlu0 0
  %441 = vperm.xlu0 %440, %v427
  %v442 = vpop.permute.xlu0 %441
  %445 = vset.pattern.permute.xlu0 0
  %446 = vperm.xlu0 %445, %v428
  %v447 = vpop.permute.xlu0 %446
  %450 = vset.pattern.permute.xlu0 0
  %451 = vperm.xlu0 %450, %v429
  %v452 = vpop.permute.xlu0 %451
  %455 = vset.pattern.permute.xlu0 0
  %456 = vperm.xlu0 %455, %v430
  %v457 = vpop.permute.xlu0 %456
  %460 = vset.pattern.permute.xlu0 0
  %461 = vperm.xlu0 %460, %v431
  %v462 = vpop.permute.xlu0 %461
  %465 = vset.pattern.permute.xlu0 0
  %466 = vperm.xlu0 %465, %v432
  %v467 = vpop.permute.xlu0 %466
  %470 = vset.pattern.permute.xlu0 0
  %471 = vperm.xlu0 %470, %v433
  %v472 = vpop.permute.xlu0 %471
  %vm474 = vcmask 523264
  %v476 = vsel %vm474, %v418, 0
  %v479 = vsel %vm474, %v419, 0
  %v482 = vsel %vm474, %v420, 0
  %v485 = vsel %vm474, %v421, 0
  %v488 = vsel %vm474, %v422, 0
  %v491 = vsel %vm474, %v423, 0
  %v494 = vsel %vm474, %v424, 0
  %v497 = vsel %vm474, %v425, 0
  %499 = vmatprep.subr.mxu0 %v403
  %500 = vmatpush1.msra.mxu0 %v402
  %501 = vmatprep.subr.mxu0 %v405
  %502 = vmatpush1.msra.mxu0 %v404
  %503 = vmatprep.subr.mxu0 %v407
  %504 = vmatpush1.msra.mxu0 %v406
  %505 = vmatprep.subr.mxu0 %v409
  %506 = vmatpush1.msra.mxu0 %v408
  %507 = vmatprep.subr.mxu0 %v411
  %508 = vmatpush1.msra.mxu0 %v410
  %509 = vmatprep.subr.mxu0 %v413
  %510 = vmatpush1.msra.mxu0 %v412
  %511 = vmatprep.subr.mxu0 %v415
  %512 = vmatpush1.msra.mxu0 %v414
  %513 = vmatprep.subr.mxu0 %v417
  %514 = vmatpush1.msra.mxu0 %v416
  %515 = vmatprep.subr.mxu0 0.0
  %516 = vmatpush1.msra.mxu0 0.0
  %517 = vmatprep.subr.mxu0 0.0
  %518 = vmatpush1.msra.mxu0 0.0
  %519 = vmatprep.subr.mxu0 0.0
  %520 = vmatpush1.msra.mxu0 0.0
  %521 = vmatprep.subr.mxu0 0.0
  %522 = vmatpush1.msra.mxu0 0.0
  %523 = vmatprep.subr.mxu0 0.0
  %524 = vmatpush1.msra.mxu0 0.0
  %525 = vmatprep.subr.mxu0 0.0
  %526 = vmatpush1.msra.mxu0 0.0
  %527 = vmatprep.subr.mxu0 0.0
  %528 = vmatpush1.msra.mxu0 0.0
  %529 = vmatprep.subr.mxu0 0.0
  %530 = vmatpush1.msra.mxu0 0.0
  %531 = vmatprep.subr.mxu0 0.0
  %532 = vmatpush1.msra.mxu0 0.0
  %533 = vmatprep.subr.mxu0 0.0
  %534 = vmatpush1.msra.mxu0 0.0
  %535 = vmatprep.subr.mxu0 0.0
  %536 = vmatpush1.msra.mxu0 0.0
  %537 = vmatprep.subr.mxu0 0.0
  %538 = vmatpush1.msra.mxu0 0.0
  %539 = vmatprep.subr.mxu0 0.0
  %540 = vmatpush1.msra.mxu0 0.0
  %541 = vmatprep.subr.mxu0 0.0
  %542 = vmatpush1.msra.mxu0 0.0
  %543 = vmatprep.subr.mxu0 0.0
  %544 = vmatpush1.msra.mxu0 0.0
  %545 = vmatprep.subr.mxu0 0.0
  %546 = vmatpush1.msra.mxu0 0.0
  %547 = vmatprep.subr.mxu0 0.0
  %548 = vmatpush1.msra.mxu0 0.0
  %549 = vmatprep.subr.mxu0 0.0
  %550 = vmatpush1.msra.mxu0 0.0
  %551 = vmatprep.subr.mxu0 0.0
  %552 = vmatpush1.msra.mxu0 0.0
  %553 = vmatprep.subr.mxu0 0.0
  %554 = vmatpush1.msra.mxu0 0.0
  %555 = vmatprep.subr.mxu0 0.0
  %556 = vmatpush1.msra.mxu0 0.0
  %557 = vmatprep.subr.mxu0 0.0
  %558 = vmatpush1.msra.mxu0 0.0
  %559 = vmatprep.subr.mxu0 0.0
  %560 = vmatpush1.msra.mxu0 0.0
  %561 = vmatprep.subr.mxu0 0.0
  %562 = vmatpush1.msra.mxu0 0.0
  %563 = vmatprep.mubr.f32.mxu0 0.0
  %564 = vmatmul.mubr.f32.gmra.mrb[0].mxu0 %v476
  %v565 = vpop.f32.mrb[0].mxu0
  %v566 = vadd.f32 %v437, %v565
  %v567 = vpop.f32.mrb[0].mxu0
  %v568 = vadd.f32 %v437, %v567
  %569 = vmatprep.mubr.f32.mxu0 0.0
  %570 = vmatmul.mubr.f32.gmra.mrb[0].mxu0 %v479
  %v571 = vpop.f32.mrb[0].mxu0
  %v572 = vadd.f32 %v442, %v571
  %v573 = vpop.f32.mrb[0].mxu0
  %v574 = vadd.f32 %v442, %v573
  %575 = vmatprep.mubr.f32.mxu0 0.0
  %576 = vmatmul.mubr.f32.gmra.mrb[0].mxu0 %v482
  %v577 = vpop.f32.mrb[0].mxu0
  %v578 = vadd.f32 %v447, %v577
  %v579 = vpop.f32.mrb[0].mxu0
  %v580 = vadd.f32 %v447, %v579
  %581 = vmatprep.mubr.f32.mxu0 0.0
  %582 = vmatmul.mubr.f32.gmra.mrb[0].mxu0 %v485
  %v583 = vpop.f32.mrb[0].mxu0
  %v584 = vadd.f32 %v452, %v583
  %v585 = vpop.f32.mrb[0].mxu0
  %v586 = vadd.f32 %v452, %v585
  %587 = vmatprep.mubr.f32.mxu0 0.0
  %588 = vmatmul.mubr.f32.gmra.mrb[0].mxu0 %v488
  %v589 = vpop.f32.mrb[0].mxu0
  %v590 = vadd.f32 %v457, %v589
  %v591 = vpop.f32.mrb[0].mxu0
  %v592 = vadd.f32 %v457, %v591
  %593 = vmatprep.mubr.f32.mxu0 0.0
  %594 = vmatmul.mubr.f32.gmra.mrb[0].mxu0 %v491
  %v595 = vpop.f32.mrb[0].mxu0
  %v596 = vadd.f32 %v462, %v595
  %v597 = vpop.f32.mrb[0].mxu0
  %v598 = vadd.f32 %v462, %v597
  %599 = vmatprep.mubr.f32.mxu0 0.0
  %600 = vmatmul.mubr.f32.gmra.mrb[0].mxu0 %v494
  %v601 = vpop.f32.mrb[0].mxu0
  %v602 = vadd.f32 %v467, %v601
  %v603 = vpop.f32.mrb[0].mxu0
  %v604 = vadd.f32 %v467, %v603
  %605 = vmatprep.mubr.f32.mxu0 0.0
  %606 = vmatmul.mubr.f32.gmra.mrb[0].mxu0 %v497
  %v607 = vpop.f32.mrb[0].mxu0
  %v608 = vadd.f32 %v472, %v607
  %v609 = vpop.f32.mrb[0].mxu0
  %v610 = vadd.f32 %v472, %v609
  %611 = vdwg.mxu0
  %v612 = vmax.f32 %v566, 0.0
  %v613 = vmax.f32 %v568, 0.0
  %v614 = vmax.f32 %v572, 0.0
  %v615 = vmax.f32 %v574, 0.0
  %v616 = vmax.f32 %v578, 0.0
  %v617 = vmax.f32 %v580, 0.0
  %v618 = vmax.f32 %v584, 0.0
  %v619 = vmax.f32 %v586, 0.0
  %v620 = vmax.f32 %v590, 0.0
  %v621 = vmax.f32 %v592, 0.0
  %v622 = vmax.f32 %v596, 0.0
  %v623 = vmax.f32 %v598, 0.0
  %v624 = vmax.f32 %v602, 0.0
  %v625 = vmax.f32 %v604, 0.0
  %v626 = vmax.f32 %v608, 0.0
  %v627 = vmax.f32 %v610, 0.0
  %v628 = vld [vmem:[%s7] sm:$0xff]
  %v629 = vld [vmem:[%s7 + $0x8] sm:$0xff]
  %v630 = vld [vmem:[%s7 + $0x10] sm:$0xff]
  %v631 = vld [vmem:[%s7 + $0x18] sm:$0xff]
  %v632 = vld [vmem:[%s7 + $0x20] sm:$0xff]
  %v633 = vld [vmem:[%s7 + $0x28] sm:$0xff]
  %v634 = vld [vmem:[%s7 + $0x30] sm:$0xff]
  %v635 = vld [vmem:[%s7 + $0x38] sm:$0xff]
  %v636 = vld [vmem:[%s8] sm:$0xff]
  %v637 = vld [vmem:[%s8 + $0x8] sm:$0xff]
  %v638 = vld [vmem:[%s8 + $0x10] sm:$0xff]
  %v639 = vld [vmem:[%s8 + $0x18] sm:$0xff]
  %v640 = vld [vmem:[%s8 + $0x20] sm:$0xff]
  %v641 = vld [vmem:[%s8 + $0x28] sm:$0xff]
  %v642 = vld [vmem:[%s8 + $0x30] sm:$0xff]
  %v643 = vld [vmem:[%s8 + $0x38] sm:$0xff]
  %645 = vset.pattern.permute.xlu0 0
  %646 = vperm.xlu0 %645, %v636
  %v647 = vpop.permute.xlu0 %646
  %650 = vset.pattern.permute.xlu0 0
  %651 = vperm.xlu0 %650, %v637
  %v652 = vpop.permute.xlu0 %651
  %655 = vset.pattern.permute.xlu0 0
  %656 = vperm.xlu0 %655, %v638
  %v657 = vpop.permute.xlu0 %656
  %660 = vset.pattern.permute.xlu0 0
  %661 = vperm.xlu0 %660, %v639
  %v662 = vpop.permute.xlu0 %661
  %665 = vset.pattern.permute.xlu0 0
  %666 = vperm.xlu0 %665, %v640
  %v667 = vpop.permute.xlu0 %666
  %670 = vset.pattern.permute.xlu0 0
  %671 = vperm.xlu0 %670, %v641
  %v672 = vpop.permute.xlu0 %671
  %675 = vset.pattern.permute.xlu0 0
  %676 = vperm.xlu0 %675, %v642
  %v677 = vpop.permute.xlu0 %676
  %680 = vset.pattern.permute.xlu0 0
  %681 = vperm.xlu0 %680, %v643
  %v682 = vpop.permute.xlu0 %681
  %v685 = vsel %vm474, %v628, 0
  %v688 = vsel %vm474, %v629, 0
  %v691 = vsel %vm474, %v630, 0
  %v694 = vsel %vm474, %v631, 0
  %v697 = vsel %vm474, %v632, 0
  %v700 = vsel %vm474, %v633, 0
  %v703 = vsel %vm474, %v634, 0
  %v706 = vsel %vm474, %v635, 0
  %708 = vmatprep.subr.mxu0 %v613
  %709 = vmatpush1.msra.mxu0 %v612
  %710 = vmatprep.subr.mxu0 %v615
  %711 = vmatpush1.msra.mxu0 %v614
  %712 = vmatprep.subr.mxu0 %v617
  %713 = vmatpush1.msra.mxu0 %v616
  %714 = vmatprep.subr.mxu0 %v619
  %715 = vmatpush1.msra.mxu0 %v618
  %716 = vmatprep.subr.mxu0 %v621
  %717 = vmatpush1.msra.mxu0 %v620
  %718 = vmatprep.subr.mxu0 %v623
  %719 = vmatpush1.msra.mxu0 %v622
  %720 = vmatprep.subr.mxu0 %v625
  %721 = vmatpush1.msra.mxu0 %v624
  %722 = vmatprep.subr.mxu0 %v627
  %723 = vmatpush1.msra.mxu0 %v626
  %724 = vmatprep.subr.mxu0 0.0
  %725 = vmatpush1.msra.mxu0 0.0
  %726 = vmatprep.subr.mxu0 0.0
  %727 = vmatpush1.msra.mxu0 0.0
  %728 = vmatprep.subr.mxu0 0.0
  %729 = vmatpush1.msra.mxu0 0.0
  %730 = vmatprep.subr.mxu0 0.0
  %731 = vmatpush1.msra.mxu0 0.0
  %732 = vmatprep.subr.mxu0 0.0
  %733 = vmatpush1.msra.mxu0 0.0
  %734 = vmatprep.subr.mxu0 0.0
  %735 = vmatpush1.msra.mxu0 0.0
  %736 = vmatprep.subr.mxu0 0.0
  %737 = vmatpush1.msra.mxu0 0.0
  %738 = vmatprep.subr.mxu0 0.0
  %739 = vmatpush1.msra.mxu0 0.0
  %740 = vmatprep.subr.mxu0 0.0
  %741 = vmatpush1.msra.mxu0 0.0
  %742 = vmatprep.subr.mxu0 0.0
  %743 = vmatpush1.msra.mxu0 0.0
  %744 = vmatprep.subr.mxu0 0.0
  %745 = vmatpush1.msra.mxu0 0.0
  %746 = vmatprep.subr.mxu0 0.0
  %747 = vmatpush1.msra.mxu0 0.0
  %748 = vmatprep.subr.mxu0 0.0
  %749 = vmatpush1.msra.mxu0 0.0
  %750 = vmatprep.subr.mxu0 0.0
  %751 = vmatpush1.msra.mxu0 0.0
  %752 = vmatprep.subr.mxu0 0.0
  %753 = vmatpush1.msra.mxu0 0.0
  %754 = vmatprep.subr.mxu0 0.0
  %755 = vmatpush1.msra.mxu0 0.0
  %756 = vmatprep.subr.mxu0 0.0
  %757 = vmatpush1.msra.mxu0 0.0
  %758 = vmatprep.subr.mxu0 0.0
  %759 = vmatpush1.msra.mxu0 0.0
  %760 = vmatprep.subr.mxu0 0.0
  %761 = vmatpush1.msra.mxu0 0.0
  %762 = vmatprep.subr.mxu0 0.0
  %763 = vmatpush1.msra.mxu0 0.0
  %764 = vmatprep.subr.mxu0 0.0
  %765 = vmatpush1.msra.mxu0 0.0
  %766 = vmatprep.subr.mxu0 0.0
  %767 = vmatpush1.msra.mxu0 0.0
  %768 = vmatprep.subr.mxu0 0.0
  %769 = vmatpush1.msra.mxu0 0.0
  %770 = vmatprep.subr.mxu0 0.0
  %771 = vmatpush1.msra.mxu0 0.0
  %772 = vmatprep.mubr.f32.mxu0 0.0
  %773 = vmatmul.mubr.f32.gmra.mrb[0].mxu0 %v685
  %v774 = vpop.f32.mrb[0].mxu0
  %v775 = vadd.f32 %v647, %v774
  %v776 = vpop.f32.mrb[0].mxu0
  %v777 = vadd.f32 %v647, %v776
  %778 = vmatprep.mubr.f32.mxu0 0.0
  %779 = vmatmul.mubr.f32.gmra.mrb[0].mxu0 %v688
  %v780 = vpop.f32.mrb[0].mxu0
  %v781 = vadd.f32 %v652, %v780
  %v782 = vpop.f32.mrb[0].mxu0
  %v783 = vadd.f32 %v652, %v782
  %784 = vmatprep.mubr.f32.mxu0 0.0
  %785 = vmatmul.mubr.f32.gmra.mrb[0].mxu0 %v691
  %v786 = vpop.f32.mrb[0].mxu0
  %v787 = vadd.f32 %v657, %v786
  %v788 = vpop.f32.mrb[0].mxu0
  %v789 = vadd.f32 %v657, %v788
  %790 = vmatprep.mubr.f32.mxu0 0.0
  %791 = vmatmul.mubr.f32.gmra.mrb[0].mxu0 %v694
  %v792 = vpop.f32.mrb[0].mxu0
  %v793 = vadd.f32 %v662, %v792
  %v794 = vpop.f32.mrb[0].mxu0
  %v795 = vadd.f32 %v662, %v794
  %796 = vmatprep.mubr.f32.mxu0 0.0
  %797 = vmatmul.mubr.f32.gmra.mrb[0].mxu0 %v697
  %v798 = vpop.f32.mrb[0].mxu0
  %v799 = vadd.f32 %v667, %v798
  %v800 = vpop.f32.mrb[0].mxu0
  %v801 = vadd.f32 %v667, %v800
  %802 = vmatprep.mubr.f32.mxu0 0.0
  %803 = vmatmul.mubr.f32.gmra.mrb[0].mxu0 %v700
  %v804 = vpop.f32.mrb[0].mxu0
  %v805 = vadd.f32 %v672, %v804
  %v806 = vpop.f32.mrb[0].mxu0
  %v807 = vadd.f32 %v672, %v806
  %808 = vmatprep.mubr.f32.mxu0 0.0
  %809 = vmatmul.mubr.f32.gmra.mrb[0].mxu0 %v703
  %v810 = vpop.f32.mrb[0].mxu0
  %v811 = vadd.f32 %v677, %v810
  %v812 = vpop.f32.mrb[0].mxu0
  %v813 = vadd.f32 %v677, %v812
  %814 = vmatprep.mubr.f32.mxu0 0.0
  %815 = vmatmul.mubr.f32.gmra.mrb[0].mxu0 %v706
  %v816 = vpop.f32.mrb[0].mxu0
  %v817 = vadd.f32 %v682, %v816
  %v818 = vpop.f32.mrb[0].mxu0
  %v819 = vadd.f32 %v682, %v818
  %820 = vdwg.mxu0
  %v821 = vmax.f32 %v775, 0.0
  %v822 = vmax.f32 %v777, 0.0
  %v823 = vmax.f32 %v781, 0.0
  %v824 = vmax.f32 %v783, 0.0
  %v825 = vmax.f32 %v787, 0.0
  %v826 = vmax.f32 %v789, 0.0
  %v827 = vmax.f32 %v793, 0.0
  %v828 = vmax.f32 %v795, 0.0
  %v829 = vmax.f32 %v799, 0.0
  %v830 = vmax.f32 %v801, 0.0
  %v831 = vmax.f32 %v805, 0.0
  %v832 = vmax.f32 %v807, 0.0
  %v833 = vmax.f32 %v811, 0.0
  %v834 = vmax.f32 %v813, 0.0
  %v835 = vmax.f32 %v817, 0.0
  %v836 = vmax.f32 %v819, 0.0
  %v837 = vld [vmem:[%s9] sm:$0xf]
  %v838 = vld [vmem:[%s10] sm:$0xf]
  %840 = vset.pattern.permute.xlu0 0
  %841 = vperm.xlu0 %840, %v838
  %v842 = vpop.permute.xlu0 %841
  %v845 = vsel %vm474, %v837, 0
  %847 = vmatprep.subr.mxu0 %v822
  %848 = vmatpush1.msra.mxu0 %v821
  %849 = vmatprep.subr.mxu0 %v824
  %850 = vmatpush1.msra.mxu0 %v823
  %851 = vmatprep.subr.mxu0 %v826
  %852 = vmatpush1.msra.mxu0 %v825
  %853 = vmatprep.subr.mxu0 %v828
  %854 = vmatpush1.msra.mxu0 %v827
  %855 = vmatprep.subr.mxu0 %v830
  %856 = vmatpush1.msra.mxu0 %v829
  %857 = vmatprep.subr.mxu0 %v832
  %858 = vmatpush1.msra.mxu0 %v831
  %859 = vmatprep.subr.mxu0 %v834
  %860 = vmatpush1.msra.mxu0 %v833
  %861 = vmatprep.subr.mxu0 %v836
  %862 = vmatpush1.msra.mxu0 %v835
  %863 = vmatprep.subr.mxu0 0.0
  %864 = vmatpush1.msra.mxu0 0.0
  %865 = vmatprep.subr.mxu0 0.0
  %866 = vmatpush1.msra.mxu0 0.0
  %867 = vmatprep.subr.mxu0 0.0
  %868 = vmatpush1.msra.mxu0 0.0
  %869 = vmatprep.subr.mxu0 0.0
  %870 = vmatpush1.msra.mxu0 0.0
  %871 = vmatprep.subr.mxu0 0.0
  %872 = vmatpush1.msra.mxu0 0.0
  %873 = vmatprep.subr.mxu0 0.0
  %874 = vmatpush1.msra.mxu0 0.0
  %875 = vmatprep.subr.mxu0 0.0
  %876 = vmatpush1.msra.mxu0 0.0
  %877 = vmatprep.subr.mxu0 0.0
  %878 = vmatpush1.msra.mxu0 0.0
  %879 = vmatprep.subr.mxu0 0.0
  %880 = vmatpush1.msra.mxu0 0.0
  %881 = vmatprep.subr.mxu0 0.0
  %882 = vmatpush1.msra.mxu0 0.0
  %883 = vmatprep.subr.mxu0 0.0
  %884 = vmatpush1.msra.mxu0 0.0
  %885 = vmatprep.subr.mxu0 0.0
  %886 = vmatpush1.msra.mxu0 0.0
  %887 = vmatprep.subr.mxu0 0.0
  %888 = vmatpush1.msra.mxu0 0.0
  %889 = vmatprep.subr.mxu0 0.0
  %890 = vmatpush1.msra.mxu0 0.0
  %891 = vmatprep.subr.mxu0 0.0
  %892 = vmatpush1.msra.mxu0 0.0
  %893 = vmatprep.subr.mxu0 0.0
  %894 = vmatpush1.msra.mxu0 0.0
  %895 = vmatprep.subr.mxu0 0.0
  %896 = vmatpush1.msra.mxu0 0.0
  %897 = vmatprep.subr.mxu0 0.0
  %898 = vmatpush1.msra.mxu0 0.0
  %899 = vmatprep.subr.mxu0 0.0
  %900 = vmatpush1.msra.mxu0 0.0
  %901 = vmatprep.subr.mxu0 0.0
  %902 = vmatpush1.msra.mxu0 0.0
  %903 = vmatprep.subr.mxu0 0.0
  %904 = vmatpush1.msra.mxu0 0.0
  %905 = vmatprep.subr.mxu0 0.0
  %906 = vmatpush1.msra.mxu0 0.0
  %907 = vmatprep.subr.mxu0 0.0
  %908 = vmatpush1.msra.mxu0 0.0
  %909 = vmatprep.subr.mxu0 0.0
  %910 = vmatpush1.msra.mxu0 0.0
  %911 = vmatprep.mubr.f32.mxu0 0.0
  %912 = vmatmul.mubr.f32.gmra.mrb[0].mxu0 %v845
  %v913 = vpop.f32.mrb[0].mxu0
  %v914 = vadd.f32 %v842, %v913
  %v915 = vpop.f32.mrb[0].mxu0
  %v916 = vadd.f32 %v842, %v915
  %917 = vdwg.mxu0
  %v920 = vcombine.low %v914, %v916
  %922 = vst [vmem:[%s11] sm:$0xff] %v920
  // Predicated region
  $region46: #{joint_mlp_forward.1} parent=0 // pred_check
    _
  $region47: #{joint_mlp_forward.1} parent=0 // pred_check_branch
    %924 = sbr.rel (0) target = $region49
  $region48: #{joint_mlp_forward.1} parent=0 // pred_region
    _
  $region49: #{joint_mlp_forward.1} parent=0 // pred_fallthru
    _
  // Predicated region
  $region50: #{joint_mlp_forward.1} parent=0 // pred_check
    _
  $region51: #{joint_mlp_forward.1} parent=0 // pred_check_branch
    %926 = sbr.rel (0) target = $region53
  $region52: #{joint_mlp_forward.1} parent=0 // pred_region
    _
  $region53: #{joint_mlp_forward.1} parent=0 // pred_fallthru
    _

</llo_original>
